<compile_context>
chip_gen: v7x
topology: tpu7x:2x2x1
jax: 0.10.0
libtpu: 0.0.40
codegen_flags: <defaults>
</compile_context>

<pallas_src>
import functools

import jax
import jax.numpy as jnp
from jax.experimental import pallas as pl
from jax.experimental.pallas import tpu as pltpu


# ---------------------------------------------------------------------------
# Kernels
# ---------------------------------------------------------------------------

def resblock_kernel(x_ref, w1t_ref, b1_ref, h_ref, *, num_layers):
    """num_layers applications of the SAME ResBlock (shared weights per head).

    x_ref  : (tm, H)    bf16  token tile (shared across heads)
    w1t_ref: (1, H, H)  bf16  this head's W1^T
    b1_ref : (1, 1, H)  f32   this head's bias
    h_ref  : (1, tm, H) bf16  output residual stream
    """
    h = x_ref[...].astype(jnp.float32)            # (tm, H) f32 residual stream
    w1t = w1t_ref[0]                              # (H, H) bf16
    b1 = b1_ref[0]                                # (1, H) f32
    for _ in range(num_layers):
        z = jnp.dot(h.astype(jnp.bfloat16), w1t,
                    preferred_element_type=jnp.float32) + b1
        h = h + z * jax.nn.sigmoid(z)             # SiLU(z) = z * sigmoid(z)
    h_ref[0] = h.astype(jnp.bfloat16)


def vocab_proj_kernel(h_ref, w2t_ref, out_ref):
    """Final Linear(hidden -> vocab, bias=False): one (tm, tv) logits tile."""
    out_ref[0] = jnp.dot(h_ref[0], w2t_ref[0],
                         preferred_element_type=jnp.float32).astype(out_ref.dtype)


# ---------------------------------------------------------------------------
# Tiling / VMEM helpers
# ---------------------------------------------------------------------------

def _round_up(x, m):
    return ((x + m - 1) // m) * m


def _vmem_capacity_bytes():
    try:
        return int(pltpu.get_tpu_info().vmem_capacity_bytes)
    except Exception:
        return 64 << 20          # conservative (v7x-sized) fallback


def _vmem_limit(est_bytes):
    cap = _vmem_capacity_bytes()
    return int(min(max(est_bytes, 16 << 20), int(cap * 0.8)))


def _res_block_bytes(tm, H):
    # 2x x tile (bf16) + 1x resident W1^T (bf16) + 2x b1 (f32) + 2x h out (bf16)
    return 2 * tm * H * 2 + H * H * 2 + 2 * H * 4 + 2 * tm * H * 2


def _voc_block_bytes(tm, tv, H, out_itemsize=4):
    # 2x h tile (bf16) + 2x W2^T tile (bf16) + 2x logits tile
    return 2 * tm * H * 2 + 2 * H * tv * 2 + 2 * tm * tv * out_itemsize


def _plan_tiles(M, H, Vp):
    """Pick (token tile, vocab tile) that fit within 80% of this chip's VMEM."""
    budget = int(_vmem_capacity_bytes() * 0.8)
    tm = min(256, _round_up(max(M, 1), 8))
    tv = 128
    for cand in (1024, 512, 256, 128):
        if Vp % cand == 0:
            tv = cand
            break
    while tm > 8 and (_res_block_bytes(tm, H) > budget
                      or _voc_block_bytes(tm, tv, H) > budget):
        tm = max(8, (tm // 2) // 8 * 8)
    while tv > 128 and _voc_block_bytes(tm, tv, H) > budget:
        tv //= 2
    return tm, tv


def _spec(block_shape, index_map, *, buffers=None):
    """BlockSpec with optional reduced pipelining depth (single-buffered weights)."""
    if buffers is not None and hasattr(pl, "Buffered"):
        try:
            return pl.BlockSpec(block_shape, index_map,
                                pipeline_mode=pl.Buffered(buffers))
        except TypeError:
            pass
    return pl.BlockSpec(block_shape, index_map)


# ---------------------------------------------------------------------------
# Pallas wrappers
# ---------------------------------------------------------------------------

def resblock_pallas(xb, w1t, b1, *, num_layers, tm):
    """xb: (Mp, H) bf16; w1t: (NH, H, H) bf16; b1: (NH, 1, H) f32 -> (NH, Mp, H) bf16."""
    Mp, H = xb.shape
    NH = w1t.shape[0]
    # W1^T is resident per head: single-buffer it when it is big enough to matter
    # (for H=4096 double-buffering would eat 64 MiB - an OOM on v7x).
    w1_buffers = 1 if (H * H * 2) >= (2 << 20) else None
    est = _res_block_bytes(tm, H) + (8 << 20)

    return pl.pallas_call(
        functools.partial(resblock_kernel, num_layers=num_layers),
        out_shape=jax.ShapeDtypeStruct((NH, Mp, H), jnp.bfloat16),
        grid_spec=pltpu.PrefetchScalarGridSpec(
            num_scalar_prefetch=0,
            grid=(NH, Mp // tm),                       # head outer -> W1 fetched once/head
            in_specs=[
                pl.BlockSpec((tm, H), lambda hd, i: (i, 0)),        # x token tile (shared)
                _spec((1, H, H), lambda hd, i: (hd, 0, 0), buffers=w1_buffers),
                _spec((1, 1, H), lambda hd, i: (hd, 0, 0), buffers=w1_buffers),
            ],
            out_specs=pl.BlockSpec((1, tm, H), lambda hd, i: (hd, i, 0)),
        ),
        compiler_params=pltpu.CompilerParams(
            dimension_semantics=("parallel", "parallel"),
            vmem_limit_bytes=_vmem_limit(est)),
    )(xb, w1t, b1)


def vocab_proj_pallas(h, w2t, *, tm, tv, out_dtype=jnp.float32):
    """h: (NH, Mp, H) bf16; w2t: (NH, H, Vp) bf16 -> (NH, Mp, Vp) logits."""
    NH, Mp, H = h.shape
    Vp = w2t.shape[2]
    est = _voc_block_bytes(tm, tv, H, jnp.dtype(out_dtype).itemsize) + (8 << 20)

    return pl.pallas_call(
        vocab_proj_kernel,
        out_shape=jax.ShapeDtypeStruct((NH, Mp, Vp), out_dtype),
        grid_spec=pltpu.PrefetchScalarGridSpec(
            num_scalar_prefetch=0,
            # vocab axis OUTSIDE tokens: each W2^T tile is DMA'd once and reused
            # across all token tiles (no per-M-tile re-streaming at prefill).
            grid=(NH, Vp // tv, Mp // tm),
            in_specs=[
                pl.BlockSpec((1, tm, H), lambda hd, j, i: (hd, i, 0)),   # h token tile
                pl.BlockSpec((1, H, tv), lambda hd, j, i: (hd, 0, j)),   # W2^T vocab tile
            ],
            out_specs=pl.BlockSpec((1, tm, tv), lambda hd, j, i: (hd, i, j)),
        ),
        compiler_params=pltpu.CompilerParams(
            dimension_semantics=("parallel", "parallel", "parallel"),
            vmem_limit_bytes=_vmem_limit(est)),
    )(h, w2t)


@functools.partial(jax.jit, static_argnames=("num_layers", "vocab"))
def _medusa_forward_2d(x2d, w1t, b1, w2t, *, num_layers, vocab):
    M, H = x2d.shape
    Vp = w2t.shape[2]
    tm, tv = _plan_tiles(M, H, Vp)
    Mp = _round_up(M, tm)

    xb = x2d.astype(jnp.bfloat16)
    if Mp != M:
        xb = jnp.pad(xb, ((0, Mp - M), (0, 0)))

    h = resblock_pallas(xb, w1t, b1, num_layers=num_layers, tm=tm)      # (NH, Mp, H)
    out = vocab_proj_pallas(h, w2t, tm=tm, tv=tv)                       # (NH, Mp, Vp)
    return out[:, :M, :vocab]


def medusa_model_forward(hidden_states, params, *, num_layers=1):
    """Equivalent of `[head(last_hidden_state) for head in self.medusa_heads]`."""
    B, S, H = hidden_states.shape
    x2d = hidden_states.reshape(B * S, H)
    logits = _medusa_forward_2d(x2d, params["w1t"], params["b1"], params["w2t"],
                                num_layers=num_layers, vocab=params["vocab"])
    return [logits[hd].reshape(B, S, -1) for hd in range(logits.shape[0])]


# ---------------------------------------------------------------------------
# Parameter setup (stacked, pre-transposed, pre-cast, vocab-padded) + reference
# ---------------------------------------------------------------------------

def make_medusa_params(key, hidden, vocab, num_heads):
    keys = jax.random.split(key, num_heads)
    bound = 1.0 / float(hidden) ** 0.5
    w1s, b1s, w2s = [], [], []
    for k in keys:
        kw1, kb1, kw2 = jax.random.split(k, 3)
        # NOTE: the PyTorch module zero-inits ResBlock.linear.weight; we use small
        # random values (as trained/loaded heads would have) so the W1 matmul path
        # is actually exercised by the correctness check.
        w1s.append(jax.random.uniform(kw1, (hidden, hidden), jnp.float32, -bound, bound))
        b1s.append(jax.random.uniform(kb1, (hidden,), jnp.float32, -bound, bound))
        w2s.append(jax.random.uniform(kw2, (vocab, hidden), jnp.float32, -bound, bound))
    w1 = jnp.stack(w1s)                                    # (NH, H, H)
    b1 = jnp.stack(b1s)                                    # (NH, H)
    w2 = jnp.stack(w2s)                                    # (NH, V, H)

    # Pad V to a lane-dense multiple so the vocab tile picker never degrades.
    v_pad = _round_up(vocab, 1024) if vocab > 1024 else _round_up(vocab, 128)
    w2t = jnp.transpose(w2, (0, 2, 1)).astype(jnp.bfloat16)            # (NH, H, V)
    if v_pad != vocab:
        w2t = jnp.pad(w2t, ((0, 0), (0, 0), (0, v_pad - vocab)))       # zero columns

    return {
        # kernel-facing (stored once: stacked + transposed + bf16-cast + padded)
        "w1t": jnp.transpose(w1, (0, 2, 1)).astype(jnp.bfloat16),      # (NH, H, H)
        "b1": b1.reshape(num_heads, 1, hidden),                        # (NH, 1, H) f32
        "w2t": w2t,                                                    # (NH, H, Vp)
        "vocab": int(vocab),
        # f32 originals for the reference
        "w1_f32": w1, "b1_f32": b1, "w2_f32": w2,
    }


def medusa_head_ref(x2d, w1, b1, w2, num_layers=1):
    """Pure-JAX reference using the same bf16-input / f32-accumulate recipe."""
    h = x2d.astype(jnp.float32)
    w1t = w1.T.astype(jnp.bfloat16)
    w2t = w2.T.astype(jnp.bfloat16)
    b1r = b1.reshape(1, -1)
    for _ in range(num_layers):
        z = jnp.dot(h.astype(jnp.bfloat16), w1t,
                    preferred_element_type=jnp.float32) + b1r
        h = h + z * jax.nn.sigmoid(z)
    return jnp.dot(h.astype(jnp.bfloat16), w2t, preferred_element_type=jnp.float32)


# ---------------------------------------------------------------------------

if __name__ == "__main__":
    batch, seq, hidden, vocab = 2, 8, 32, 256
    medusa_num_heads, medusa_num_layers = 4, 1

    key = jax.random.PRNGKey(0)
    kx, kp = jax.random.split(key)

    x = jax.random.normal(kx, (batch, seq, hidden), dtype=jnp.float32)
    params = make_medusa_params(kp, hidden, vocab, medusa_num_heads)

    medusa_logits = medusa_model_forward(x, params, num_layers=medusa_num_layers)
    jax.block_until_ready(medusa_logits)

    x2d = x.reshape(batch * seq, hidden)
    for h_idx, out in enumerate(medusa_logits):
        assert out.shape == (batch, seq, vocab), f"head {h_idx} bad shape {out.shape}"
        ref = medusa_head_ref(x2d, params["w1_f32"][h_idx], params["b1_f32"][h_idx],
                              params["w2_f32"][h_idx],
                              medusa_num_layers).reshape(batch, seq, vocab)
        assert jnp.allclose(out, ref, atol=2e-2, rtol=2e-2), f"head {h_idx} mismatch"

    print("KERNEL_OK")
</pallas_src>

<mosaic_0001>
module attributes {stable_mosaic.version = 11 : i64} {
  func.func @vocab_proj_kernel(%arg0: i32, %arg1: i32, %arg2: i32, %arg3: memref<1x16x32xbf16, #tpu.memory_space<vmem>>, %arg4: memref<1x32x256xbf16, #tpu.memory_space<vmem>>, %arg5: memref<1x16x256xf32, #tpu.memory_space<vmem>>) attributes {dimension_semantics = [#tpu.dimension_semantics<parallel>, #tpu.dimension_semantics<parallel>, #tpu.dimension_semantics<parallel>], iteration_bounds = array<i64: 4, 1, 1>, scalar_prefetch = 0 : i64, scratch_operands = 0 : i64, tpu.core_type = #tpu.core_type<tc>, window_params = [{transform_indices = @transform_0, window_bounds = array<i64: 1, 16, 32>}, {transform_indices = @transform_1, window_bounds = array<i64: 1, 32, 256>}, {transform_indices = @transform_2, window_bounds = array<i64: 1, 16, 256>}]} {
    %c0 = arith.constant 0 : index
    %c0_0 = arith.constant 0 : index
    %c0_1 = arith.constant 0 : index
    %0 = vector.load %arg3[%c0, %c0_0, %c0_1] : memref<1x16x32xbf16, #tpu.memory_space<vmem>>, vector<1x16x32xbf16>
    %1 = vector.shape_cast %0 : vector<1x16x32xbf16> to vector<16x32xbf16>
    %c0_2 = arith.constant 0 : index
    %c0_3 = arith.constant 0 : index
    %c0_4 = arith.constant 0 : index
    %2 = vector.load %arg4[%c0_2, %c0_3, %c0_4] : memref<1x32x256xbf16, #tpu.memory_space<vmem>>, vector<1x32x256xbf16>
    %3 = vector.shape_cast %2 : vector<1x32x256xbf16> to vector<32x256xbf16>
    %cst = arith.constant dense<0.000000e+00> : vector<16x256xf32>
    %4 = tpu.matmul %1, %3, %cst {dimension_numbers = #tpu.dot_dimension_numbers<[1], [0], [0], [1], [0, 0, 1, 1], [], []>} : vector<16x32xbf16>, vector<32x256xbf16>, vector<16x256xf32> -> vector<16x256xf32>
    %c0_5 = arith.constant 0 : index
    %c0_6 = arith.constant 0 : index
    %c0_7 = arith.constant 0 : index
    %5 = vector.load %arg5[%c0_5, %c0_6, %c0_7] : memref<1x16x256xf32, #tpu.memory_space<vmem>>, vector<1x16x256xf32>
    %6 = vector.shape_cast %5 : vector<1x16x256xf32> to vector<16x256xf32>
    %7 = vector.shape_cast %4 : vector<16x256xf32> to vector<1x16x256xf32>
    tpu.vector_store %arg5[%c0_5, %c0_6, %c0_7], %7 {strides = array<i32>} : memref<1x16x256xf32, #tpu.memory_space<vmem>>, vector<1x16x256xf32>,
    return
  }
  func.func @transform_0(%arg0: i32, %arg1: i32, %arg2: i32) -> (i32, i32, i32) {
    %c0_i32 = arith.constant 0 : i32
    %c0_i32_0 = arith.constant 0 : i32
    return %arg0, %arg2, %c0_i32 : i32, i32, i32
  }
  func.func @transform_1(%arg0: i32, %arg1: i32, %arg2: i32) -> (i32, i32, i32) {
    %c0_i32 = arith.constant 0 : i32
    %c0_i32_0 = arith.constant 0 : i32
    return %arg0, %c0_i32, %arg1 : i32, i32, i32
  }
  func.func @transform_2(%arg0: i32, %arg1: i32, %arg2: i32) -> (i32, i32, i32) {
    %c0_i32 = arith.constant 0 : i32
    return %arg0, %arg2, %arg1 : i32, i32, i32
  }
}

module attributes {stable_mosaic.version = 11 : i64} {
  func.func @resblock_kernel(%arg0: i32, %arg1: i32, %arg2: memref<16x32xbf16, #tpu.memory_space<vmem>>, %arg3: memref<1x32x32xbf16, #tpu.memory_space<vmem>>, %arg4: memref<1x1x32xf32, #tpu.memory_space<vmem>>, %arg5: memref<1x16x32xbf16, #tpu.memory_space<vmem>>) attributes {dimension_semantics = [#tpu.dimension_semantics<parallel>, #tpu.dimension_semantics<parallel>], iteration_bounds = array<i64: 4, 1>, scalar_prefetch = 0 : i64, scratch_operands = 0 : i64, tpu.core_type = #tpu.core_type<tc>, window_params = [{transform_indices = @transform_0, window_bounds = array<i64: 16, 32>}, {transform_indices = @transform_1, window_bounds = array<i64: 1, 32, 32>}, {transform_indices = @transform_2, window_bounds = array<i64: 1, 1, 32>}, {transform_indices = @transform_3, window_bounds = array<i64: 1, 16, 32>}]} {
    %c0 = arith.constant 0 : index
    %c0_0 = arith.constant 0 : index
    %0 = vector.load %arg2[%c0, %c0_0] : memref<16x32xbf16, #tpu.memory_space<vmem>>, vector<16x32xbf16>
    %1 = arith.extf %0 : vector<16x32xbf16> to vector<16x32xf32>
    %c0_1 = arith.constant 0 : index
    %c0_2 = arith.constant 0 : index
    %c0_3 = arith.constant 0 : index
    %2 = vector.load %arg3[%c0_1, %c0_2, %c0_3] : memref<1x32x32xbf16, #tpu.memory_space<vmem>>, vector<1x32x32xbf16>
    %3 = vector.shape_cast %2 : vector<1x32x32xbf16> to vector<32x32xbf16>
    %c0_4 = arith.constant 0 : index
    %c0_5 = arith.constant 0 : index
    %c0_6 = arith.constant 0 : index
    %4 = vector.load %arg4[%c0_4, %c0_5, %c0_6] : memref<1x1x32xf32, #tpu.memory_space<vmem>>, vector<1x1x32xf32>
    %5 = vector.shape_cast %4 : vector<1x1x32xf32> to vector<1x32xf32>
    %6 = arith.truncf %1 : vector<16x32xf32> to vector<16x32xbf16>
    %cst = arith.constant dense<0.000000e+00> : vector<16x32xf32>
    %7 = tpu.matmul %6, %3, %cst {dimension_numbers = #tpu.dot_dimension_numbers<[1], [0], [0], [1], [0, 0, 1, 1], [], []>} : vector<16x32xbf16>, vector<32x32xbf16>, vector<16x32xf32> -> vector<16x32xf32>
    %8 = vector.broadcast %5 : vector<1x32xf32> to vector<16x32xf32>
    %9 = arith.addf %7, %8 : vector<16x32xf32>
    %10 = arith.negf %9 : vector<16x32xf32>
    %11 = math.exp %10 : vector<16x32xf32>
    %cst_7 = arith.constant 1.000000e+00 : f32
    %12 = vector.broadcast %cst_7 : f32 to vector<16x32xf32>
    %13 = arith.addf %12, %11 : vector<16x32xf32>
    %14 = arith.divf %12, %13 : vector<16x32xf32>
    %15 = arith.mulf %9, %14 : vector<16x32xf32>
    %16 = arith.addf %1, %15 : vector<16x32xf32>
    %17 = arith.truncf %16 : vector<16x32xf32> to vector<16x32xbf16>
    %c0_8 = arith.constant 0 : index
    %c0_9 = arith.constant 0 : index
    %c0_10 = arith.constant 0 : index
    %18 = vector.load %arg5[%c0_8, %c0_9, %c0_10] : memref<1x16x32xbf16, #tpu.memory_space<vmem>>, vector<1x16x32xbf16>
    %19 = vector.shape_cast %18 : vector<1x16x32xbf16> to vector<16x32xbf16>
    %20 = vector.shape_cast %17 : vector<16x32xbf16> to vector<1x16x32xbf16>
    tpu.vector_store %arg5[%c0_8, %c0_9, %c0_10], %20 {strides = array<i32>} : memref<1x16x32xbf16, #tpu.memory_space<vmem>>, vector<1x16x32xbf16>,
    return
  }
  func.func @transform_0(%arg0: i32, %arg1: i32) -> (i32, i32) {
    %c0_i32 = arith.constant 0 : i32
    %c0_i32_0 = arith.constant 0 : i32
    return %arg1, %c0_i32 : i32, i32
  }
  func.func @transform_1(%arg0: i32, %arg1: i32) -> (i32, i32, i32) {
    %c0_i32 = arith.constant 0 : i32
    %c0_i32_0 = arith.constant 0 : i32
    %c0_i32_1 = arith.constant 0 : i32
    return %arg0, %c0_i32, %c0_i32_0 : i32, i32, i32
  }
  func.func @transform_2(%arg0: i32, %arg1: i32) -> (i32, i32, i32) {
    %c0_i32 = arith.constant 0 : i32
    %c0_i32_0 = arith.constant 0 : i32
    %c0_i32_1 = arith.constant 0 : i32
    return %arg0, %c0_i32, %c0_i32_0 : i32, i32, i32
  }
  func.func @transform_3(%arg0: i32, %arg1: i32) -> (i32, i32, i32) {
    %c0_i32 = arith.constant 0 : i32
    %c0_i32_0 = arith.constant 0 : i32
    return %arg0, %arg1, %c0_i32 : i32, i32, i32
  }
}

</mosaic_0001>

<llo_original>
// kernel: _medusa_forward_2d.2
$region0: #{_medusa_forward_2d.2}
  #allocation0 [shape = 'u32[]', space=smem, size = 0x4, offset = 0x4, fixed_abs, tag = 'smem constant byte address 0x4 - core index']
  #allocation1 [shape = 'u32[144,128]{1,0:T(1,128)}', space=vmem, size = 0x12000, scoped, tag = 'internal scratch']
  %s0 = inlined_call_operand.vmem [shape: bf16[16,32], index: 0, kind: input, shape index: {}]
  %s1 = inlined_call_operand.hbm [shape: bf16[4,32,32], index: 1, kind: input, shape index: {}]
  %s2 = inlined_call_operand.hbm [shape: f32[4,1,32], index: 2, kind: input, shape index: {}]
  %s3 = inlined_call_operand.vmem [shape: bf16[4,16,32], index: 3, kind: output, shape index: {}]
  %s4 = sld [smem:[#allocation0]]
  $region53: #{_medusa_forward_2d.2} parent=0
    _
  %s6 = ssub.s32 1, %s4
  %s7 = scalar_select 0, %s6, %s4
  $region1: #{_medusa_forward_2d.2} parent=0
    #allocation2 [shape = 'u8[16384]{0}', space=vmem, size = 0x4000, scoped, tag = 'input window, operand 1']
    #allocation3 [shape = 's32[2]{0}', space=sflag, size = 0x8, scoped, tag = 'scoped memory for _medusa_forward_2d.2']
    #allocation4 [shape = 'u8[1024]{0}', space=vmem, size = 0x400, scoped, tag = 'input window, operand 2']
    #allocation5 [shape = 's32[2]{0}', space=sflag, size = 0x8, scoped, tag = 'scoped memory for _medusa_forward_2d.2']
    %8 = vsyncpa [#allocation3], 0
    %s9 = scalar_lea.sflag [#allocation3], 1
    %10 = vsyncpa %s9, 0
    %11 = vsyncpa [#allocation5], 0
    %s12 = scalar_lea.sflag [#allocation5], 1
    %13 = vsyncpa %s12, 0
    loop: start=0, step=1, limit=6
    $region2: #{_medusa_forward_2d.2} parent=1 // loop_pre_header
      _
    $region3: #{_medusa_forward_2d.2} parent=1 // loop_header
      %s15 = sphi 0, %s19
      %p16 = scmp.ge.s32.totalorder %s15, 6
      %s22 = sphi 0, %s34
      %s23 = sphi 0, %s30
      %s24 = sphi 0, %s22
      %s25 = sphi 0, %s23
      %s26 = sphi 0, %s24
      %s27 = sphi 0, %s25
      %s37 = sphi 0, %s39
      %s40 = sphi 0, %s37
      %s41 = sphi 0, %s40
      %s57 = sphi 0, %s41
      %s63 = sphi 0, %s65
      %s66 = sphi 0, %s63
      %s67 = sphi 0, %s66
      %s83 = sphi 0, %s67
      %s89 = sphi 0, %s91
      %s92 = sphi 0, %s89
      %s93 = sphi 0, %s92
      %s109 = sphi 0, %s93
      %s117 = sphi 0, %s119
      %s120 = sphi 0, %s117
      %s121 = sphi 0, %s120
      %s137 = sphi 0, %s121
    $region4: #{_medusa_forward_2d.2} parent=1 // loop_header_branch
      %18 = sbr.rel (%p16) target = $region8
    $region5: #{_medusa_forward_2d.2} parent=1 // loop_body
      %s20 = ssub.s32 %s15, 1
      %s21 = ssub.s32 %s15, 2
      %s28 = sadd.s32 1, %s23
      %p29 = scmp.ge.s32.totalorder %s28, 1
      %s30 = scalar_select %p29, 0, %s28
      %s31 = sadd.s32 1, %s22
      %s32 = scalar_select %p29, %s31, %s22
      %p33 = scmp.ge.s32.totalorder %s32, 4
      %s34 = scalar_select %p33, 0, %s32
      %s35 = ssub.s32 %s23, %s30
      %p36 = scmp.eq.s32.totalorder %s35, 0
      %s38 = sadd.s32 %s37, 1
      %s39 = scalar_select %p36, %s37, %s38
      %p42 = pneg %p36
      %p43 = scmp.eq.s32.totalorder %s15, 3
      %p44 = por %p42, %p43
      %p45 = scmp.ne.s32.totalorder %s37, %s40
      %p46 = scmp.eq.s32.totalorder %s15, 0
      %p47 = por %p45, %p46
      %p48 = scmp.ne.s32.totalorder %s37, %s40
      %p49 = scmp.eq.s32.totalorder %s20, 3
      %p50 = por %p48, %p49
      %p51 = scmp.ne.s32.totalorder %s40, %s41
      %p52 = scmp.eq.s32.totalorder %s20, 0
      %p53 = por %p51, %p52
      %p54 = scmp.ne.s32.totalorder %s40, %s41
      %p55 = scmp.eq.s32.totalorder %s21, 3
      %p56 = por %p54, %p55
      %p58 = scmp.ne.s32.totalorder %s41, %s57
      %p59 = scmp.eq.s32.totalorder %s21, 0
      %p60 = por %p58, %p59
      %s61 = ssub.s32 %s22, %s34
      %p62 = scmp.eq.s32.totalorder %s61, 0
      %s64 = sadd.s32 %s63, 1
      %s65 = scalar_select %p62, %s63, %s64
      %p68 = pneg %p62
      %p69 = scmp.eq.s32.totalorder %s15, 3
      %p70 = por %p68, %p69
      %p71 = scmp.ne.s32.totalorder %s63, %s66
      %p72 = scmp.eq.s32.totalorder %s15, 0
      %p73 = por %p71, %p72
      %p74 = scmp.ne.s32.totalorder %s63, %s66
      %p75 = scmp.eq.s32.totalorder %s20, 3
      %p76 = por %p74, %p75
      %p77 = scmp.ne.s32.totalorder %s66, %s67
      %p78 = scmp.eq.s32.totalorder %s20, 0
      %p79 = por %p77, %p78
      %p80 = scmp.ne.s32.totalorder %s66, %s67
      %p81 = scmp.eq.s32.totalorder %s21, 3
      %p82 = por %p80, %p81
      %p84 = scmp.ne.s32.totalorder %s67, %s83
      %p85 = scmp.eq.s32.totalorder %s21, 0
      %p86 = por %p84, %p85
      %s87 = ssub.s32 %s22, %s34
      %p88 = scmp.eq.s32.totalorder %s87, 0
      %s90 = sadd.s32 %s89, 1
      %s91 = scalar_select %p88, %s89, %s90
      %p94 = pneg %p88
      %p95 = scmp.eq.s32.totalorder %s15, 3
      %p96 = por %p94, %p95
      %p97 = scmp.ne.s32.totalorder %s89, %s92
      %p98 = scmp.eq.s32.totalorder %s15, 0
      %p99 = por %p97, %p98
      %p100 = scmp.ne.s32.totalorder %s89, %s92
      %p101 = scmp.eq.s32.totalorder %s20, 3
      %p102 = por %p100, %p101
      %p103 = scmp.ne.s32.totalorder %s92, %s93
      %p104 = scmp.eq.s32.totalorder %s20, 0
      %p105 = por %p103, %p104
      %p106 = scmp.ne.s32.totalorder %s92, %s93
      %p107 = scmp.eq.s32.totalorder %s21, 3
      %p108 = por %p106, %p107
      %p110 = scmp.ne.s32.totalorder %s93, %s109
      %p111 = scmp.eq.s32.totalorder %s21, 0
      %p112 = por %p110, %p111
      %s113 = ssub.s32 %s22, %s34
      %s114 = ssub.s32 %s23, %s30
      %s115 = sor.u32 %s113, %s114
      %p116 = scmp.eq.s32.totalorder %s115, 0
      %s118 = sadd.s32 %s117, 1
      %s119 = scalar_select %p116, %s117, %s118
      %p122 = pneg %p116
      %p123 = scmp.eq.s32.totalorder %s15, 3
      %p124 = por %p122, %p123
      %p125 = scmp.ne.s32.totalorder %s117, %s120
      %p126 = scmp.eq.s32.totalorder %s15, 0
      %p127 = por %p125, %p126
      %p128 = scmp.ne.s32.totalorder %s117, %s120
      %p129 = scmp.eq.s32.totalorder %s20, 3
      %p130 = por %p128, %p129
      %p131 = scmp.ne.s32.totalorder %s120, %s121
      %p132 = scmp.eq.s32.totalorder %s20, 0
      %p133 = por %p131, %p132
      %p134 = scmp.ne.s32.totalorder %s120, %s121
      %p135 = scmp.eq.s32.totalorder %s21, 3
      %p136 = por %p134, %p135
      %p138 = scmp.ne.s32.totalorder %s121, %s137
      %p139 = scmp.eq.s32.totalorder %s21, 0
      %p140 = por %p138, %p139
      %p141 = scmp.le.s32.totalorder 1, %s15
      %p142 = scmp.lt.s32.totalorder %s15, 5
      %p143 = pnand %p141, %p142
      %p144 = pneg %p143
      // Predicated region
      $region9: #{_medusa_forward_2d.2} parent=5 // pred_check
        _
      $region10: #{_medusa_forward_2d.2} parent=5 // pred_check_branch
        %146 = sbr.rel (%p143) target = $region12
      $region11: #{_medusa_forward_2d.2} parent=5 // pred_region
        %s147 = ssub.s32 %s15, 1
        // Predicated region
        $region13: #{_medusa_forward_2d.2} parent=11 // pred_check
          %p148 = pneg %p53
        $region14: #{_medusa_forward_2d.2} parent=11 // pred_check_branch
          %150 = sbr.rel (%p148) target = $region16
        $region15: #{_medusa_forward_2d.2} parent=11 // pred_region
          %s151 = smul.u32 2, %s25
          %p152 = scmp.lt.s32.totalorder %s151, 1
          %s153 = scalar_select %p152, %s151, 1
          %s154 = smul.addr %s153, 4
          %s155 = scalar_lea.vmem %s0, %s154
          %s156 = smul.u32 2, %s25
        $region16: #{_medusa_forward_2d.2} parent=11 // pred_fallthru
          _
      $region12: #{_medusa_forward_2d.2} parent=5 // pred_fallthru
        _
      %p157 = scmp.lt.s32.totalorder %s15, 4
      // Predicated region
      $region17: #{_medusa_forward_2d.2} parent=5 // pred_check
        %p158 = pneg %p157
      $region18: #{_medusa_forward_2d.2} parent=5 // pred_check_branch
        %160 = sbr.rel (%p158) target = $region20
      $region19: #{_medusa_forward_2d.2} parent=5 // pred_region
        // Predicated region
        $region21: #{_medusa_forward_2d.2} parent=19 // pred_check
          %p161 = pneg %p73
        $region22: #{_medusa_forward_2d.2} parent=19 // pred_check_branch
          %163 = sbr.rel (%p161) target = $region24
        $region23: #{_medusa_forward_2d.2} parent=19 // pred_region
          %s164 = sand.u32 %s63, 1
          %s165 = scalar_lea.sflag [#allocation3], %s164
          %s166 = sand.u32 %s63, 1
          %s167 = smul.addr %s166, 16
          %s168 = scalar_lea.vmem [#allocation2], %s167
          %s170 = ssub.s32 256, 256
          %171 = vsyncadd %s165, %s170
          %s172 = smul.addr %s22, 4
          %s173 = smul.addr %s172, 64
          %s174 = scalar_lea.hbm %s1, %s173
          %s175 = sshll.u32 %s168, 4
          %s176 = int_to_ptr.vmem [resolvable:$true] %s175
          %181 = dma.hbm_to_vmem [thread:$0]  %s174, 256, %s176, %s165, 64, 64, 4
        $region24: #{_medusa_forward_2d.2} parent=19 // pred_fallthru
          _
        // Predicated region
        $region25: #{_medusa_forward_2d.2} parent=19 // pred_check
          %p182 = pneg %p99
        $region26: #{_medusa_forward_2d.2} parent=19 // pred_check_branch
          %184 = sbr.rel (%p182) target = $region28
        $region27: #{_medusa_forward_2d.2} parent=19 // pred_region
          %s185 = sand.u32 %s89, 1
          %s186 = scalar_lea.sflag [#allocation5], %s185
          %s187 = sand.u32 %s89, 1
          %s188 = scalar_lea.vmem [#allocation4], %s187
          %s190 = ssub.s32 16, 16
          %191 = vsyncadd %s186, %s190
          %s192 = smul.addr %s22, 16
          %s193 = scalar_lea.hbm %s2, %s192
          %s195 = sshll.u32 %s188, 4
          %s196 = int_to_ptr.vmem [resolvable:$true] %s195
          %198 = dma.hbm_to_vmem [thread:$0]  %s193, 16, %s196, %s186
        $region28: #{_medusa_forward_2d.2} parent=19 // pred_fallthru
          _
      $region20: #{_medusa_forward_2d.2} parent=5 // pred_fallthru
        _
      %p199 = scmp.le.s32.totalorder 1, %s15
      %p200 = scmp.lt.s32.totalorder %s15, 5
      %p201 = pnand %p199, %p200
      %p202 = pneg %p201
      // Predicated region
      $region29: #{_medusa_forward_2d.2} parent=5 // pred_check
        _
      $region30: #{_medusa_forward_2d.2} parent=5 // pred_check_branch
        %204 = sbr.rel (%p201) target = $region32
      $region31: #{_medusa_forward_2d.2} parent=5 // pred_region
        %s205 = ssub.s32 %s15, 1
        %s206 = sand.u32 %s66, 1
        %s207 = scalar_lea.sflag [#allocation3], %s206
        %s208 = sand.u32 %s66, 1
        %s209 = smul.addr %s208, 16
        %s210 = scalar_lea.vmem [#allocation2], %s209
        // Predicated region
        $region33: #{_medusa_forward_2d.2} parent=31 // pred_check
          %p211 = pneg %p79
        $region34: #{_medusa_forward_2d.2} parent=31 // pred_check_branch
          %213 = sbr.rel (%p211) target = $region36
        $region35: #{_medusa_forward_2d.2} parent=31 // pred_region
          %214 = dma.done %s207, 256
        $region36: #{_medusa_forward_2d.2} parent=31 // pred_fallthru
          _
        %s215 = sand.u32 %s92, 1
        %s216 = scalar_lea.sflag [#allocation5], %s215
        %s217 = sand.u32 %s92, 1
        %s218 = scalar_lea.vmem [#allocation4], %s217
        // Predicated region
        $region37: #{_medusa_forward_2d.2} parent=31 // pred_check
          %p219 = pneg %p105
        $region38: #{_medusa_forward_2d.2} parent=31 // pred_check_branch
          %221 = sbr.rel (%p219) target = $region40
        $region39: #{_medusa_forward_2d.2} parent=31 // pred_region
          %222 = dma.done %s216, 16
        $region40: #{_medusa_forward_2d.2} parent=31 // pred_fallthru
          _
        %s223 = smul.u32 2, %s25
        %p224 = scmp.lt.s32.totalorder %s223, 1
        %s225 = scalar_select %p224, %s223, 1
        %s226 = smul.addr %s225, 4
        %s227 = scalar_lea.vmem %s0, %s226
        %p228 = pneg %p53
        %p229 = pneg %p50
        %s230 = sand.u32 %s66, 1
        %s231 = scalar_lea.sflag [#allocation3], %s230
        %s232 = sand.u32 %s66, 1
        %s233 = smul.addr %s232, 16
        %s234 = scalar_lea.vmem [#allocation2], %s233
        %p235 = pneg %p79
        %p236 = pneg %p76
        %s237 = sand.u32 %s92, 1
        %s238 = scalar_lea.sflag [#allocation5], %s237
        %s239 = sand.u32 %s92, 1
        %s240 = scalar_lea.vmem [#allocation4], %s239
        %p241 = pneg %p105
        %p242 = pneg %p102
        %p243 = pneg %p133
        %p244 = pneg %p130
        %s245 = smul.u32 2, %s25
        %p246 = scmp.lt.s32.totalorder %s24, 3
        %s247 = scalar_select %p246, %s24, 3
        %p248 = scmp.lt.s32.totalorder %s245, 1
        %s249 = scalar_select %p248, %s245, 1
        %s250 = smul.addr %s247, 2
        %s251 = sadd.s32 %s249, %s250
        %s252 = smul.addr %s251, 4
        %s253 = scalar_lea.vmem %s3, %s252
        %s254 = smul.u32 2, %s25
        %p255 = scmp.lt.s32.totalorder %s254, 1
        %s256 = scalar_select %p255, %s254, 1
        %s257 = smul.addr %s256, 4
        %s258 = scalar_lea.vmem %s0, %s257
        %s259 = smul.u32 2, %s25
        %s260 = smul.u32 2, %s25
        %p261 = scmp.lt.s32.totalorder %s24, 3
        %s262 = scalar_select %p261, %s24, 3
        %p263 = scmp.lt.s32.totalorder %s260, 1
        %s264 = scalar_select %p263, %s260, 1
        %s265 = smul.addr %s262, 2
        %s266 = sadd.s32 %s264, %s265
        %s267 = smul.addr %s266, 4
        %s268 = scalar_lea.vmem %s3, %s267
        %s269 = smul.u32 2, %s25
        %v271 = vld [vmem:[%s258] sm:$0xf]
        %v272 = vld [vmem:[%s258 + $0x4] sm:$0xf]
        %v273 = vunpack.c.l.bf16 %v271
        %v274 = vunpack.c.l.bf16 %v272
        %v275 = vld [vmem:[%s210] sm:$0xf]
        %v276 = vld [vmem:[%s210 + $0x4] sm:$0xf]
        %v277 = vld [vmem:[%s210 + $0x8] sm:$0xf]
        %v278 = vld [vmem:[%s210 + $0xc] sm:$0xf]
        %v279 = vld [vmem:[%s218] sm:$0x1]
        %v281 = vlaneseq
        %v282 = vshrl.u32 %v281, 7
        %v283 = vsub.s32 0, %v282
        %v284 = vrot.slane %v279, %v283
        %v288 = vunpack.c.l.b16 %v271
        %v289 = vunpack.c.l.b16 %v272
        %v290 = vpack.c.b16 %v289, %v288
        %v295 = vunpack.c.l.b16 %v275
        %v296 = vunpack.c.l.b16 %v276
        %v297 = vunpack.c.l.b16 %v277
        %v298 = vunpack.c.l.b16 %v278
        %v299 = vpack.c.b16 %v296, %v295
        %v300 = vpack.c.b16 %v298, %v297
        %vm303 = vcmask 261120
        %v305 = vsel %vm303, %v290, 0
        %307 = vmatprep.subr.bf16.mxu0 0
        %308 = vmatpush1.bf16.msra.mxu0 %v299
        %309 = vmatprep.subr.bf16.mxu0 0
        %310 = vmatpush1.bf16.msra.mxu0 %v300
        %311 = vmatprep.subr.bf16.mxu0 0
        %312 = vmatpush1.bf16.msra.mxu0 0
        %313 = vmatprep.subr.bf16.mxu0 0
        %314 = vmatpush1.bf16.msra.mxu0 0
        %315 = vmatprep.subr.bf16.mxu0 0
        %316 = vmatpush1.bf16.msra.mxu0 0
        %317 = vmatprep.subr.bf16.mxu0 0
        %318 = vmatpush1.bf16.msra.mxu0 0
        %319 = vmatprep.subr.bf16.mxu0 0
        %320 = vmatpush1.bf16.msra.mxu0 0
        %321 = vmatprep.subr.bf16.mxu0 0
        %322 = vmatpush1.bf16.msra.mxu0 0
        %323 = vmatprep.subr.bf16.mxu0 0
        %324 = vmatpush1.bf16.msra.mxu0 0
        %325 = vmatprep.subr.bf16.mxu0 0
        %326 = vmatpush1.bf16.msra.mxu0 0
        %327 = vmatprep.subr.bf16.mxu0 0
        %328 = vmatpush1.bf16.msra.mxu0 0
        %329 = vmatprep.subr.bf16.mxu0 0
        %330 = vmatpush1.bf16.msra.mxu0 0
        %331 = vmatprep.subr.bf16.mxu0 0
        %332 = vmatpush1.bf16.msra.mxu0 0
        %333 = vmatprep.subr.bf16.mxu0 0
        %334 = vmatpush1.bf16.msra.mxu0 0
        %335 = vmatprep.subr.bf16.mxu0 0
        %336 = vmatpush1.bf16.msra.mxu0 0
        %337 = vmatprep.subr.bf16.mxu0 0
        %338 = vmatpush1.bf16.msra.mxu0 0
        %339 = vmatprep.mubr.bf16.mxu0 0
        %340 = vmatmul.mubr.bf16.gmra.mrb[0].mxu0 %v305
        %v341 = vpop.f32.mrb[0].mxu0
        %v342 = vadd.f32 %v284, %v341
        %v343 = vpop.f32.mrb[0].mxu0
        %v344 = vpop.f32.mrb[0].mxu0
        %v345 = vadd.f32 %v284, %v344
        %v346 = vpop.f32.mrb[0].mxu0
        %347 = vdwg.mxu0
        %v348 = vxor.u32 %v342, 2147483648
        %v349 = vxor.u32 %v345, 2147483648
        %v350 = vmul.f32 %v348, 1.442695
        %v351 = vpow.pop %v350
        %v352 = vmul.f32 %v349, 1.442695
        %v353 = vpow.pop %v352
        %v354 = vadd.f32 %v351, 1.0
        %v355 = vadd.f32 %v353, 1.0
        %v356 = vrcp.pop %v354
        %v357 = vmul.f32 1.0, %v356
        %v358 = vrcp.pop %v355
        %v359 = vmul.f32 1.0, %v358
        %v360 = vmul.f32 %v342, %v357
        %v361 = vmul.f32 %v345, %v359
        %v362 = vadd.f32 %v273, %v360
        %v363 = vadd.f32 %v274, %v361
        %v364 = vpack.c.bf16 %v363, %v362
        %v366 = vunpack.c.l.b16 %v364
        %v367 = vunpack.c.h.b16 %v364
        %v368 = vpack.c.b16 %v366, %v366
        %v369 = vpack.c.b16 %v367, %v367
        %vm372 = vcmask 257024
        %373 = vst.msk [vmem:[%s268] sm:$0xf] %vm372, %v368
        %374 = vst.msk [vmem:[%s268 + $0x4] sm:$0xf] %vm372, %v369
        %s375 = smul.u32 2, %s25
        %p376 = scmp.lt.s32.totalorder %s24, 3
        %s377 = scalar_select %p376, %s24, 3
        %p378 = scmp.lt.s32.totalorder %s375, 1
        %s379 = scalar_select %p378, %s375, 1
        %s380 = smul.addr %s377, 2
        %s381 = sadd.s32 %s379, %s380
        %s382 = smul.addr %s381, 4
        %s383 = scalar_lea.vmem %s3, %s382
        // Predicated region
        $region41: #{_medusa_forward_2d.2} parent=31 // pred_check
          %p384 = pneg %p130
        $region42: #{_medusa_forward_2d.2} parent=31 // pred_check_branch
          %386 = sbr.rel (%p384) target = $region44
        $region43: #{_medusa_forward_2d.2} parent=31 // pred_region
          %s387 = smul.u32 2, %s25
        $region44: #{_medusa_forward_2d.2} parent=31 // pred_fallthru
          _
      $region32: #{_medusa_forward_2d.2} parent=5 // pred_fallthru
        _
      %p388 = scmp.le.s32.totalorder 2, %s15
      // Predicated region
      $region45: #{_medusa_forward_2d.2} parent=5 // pred_check
        %p389 = pneg %p388
      $region46: #{_medusa_forward_2d.2} parent=5 // pred_check_branch
        %391 = sbr.rel (%p389) target = $region48
      $region47: #{_medusa_forward_2d.2} parent=5 // pred_region
        %s392 = ssub.s32 %s15, 2
        // Predicated region
        $region49: #{_medusa_forward_2d.2} parent=47 // pred_check
          %p393 = pneg %p136
        $region50: #{_medusa_forward_2d.2} parent=47 // pred_check_branch
          %395 = sbr.rel (%p393) target = $region52
        $region51: #{_medusa_forward_2d.2} parent=47 // pred_region
          %s396 = smul.u32 2, %s27
          %p397 = scmp.lt.s32.totalorder %s26, 3
          %s398 = scalar_select %p397, %s26, 3
          %p399 = scmp.lt.s32.totalorder %s396, 1
          %s400 = scalar_select %p399, %s396, 1
          %s401 = smul.addr %s398, 2
          %s402 = sadd.s32 %s400, %s401
          %s403 = smul.addr %s402, 4
          %s404 = scalar_lea.vmem %s3, %s403
        $region52: #{_medusa_forward_2d.2} parent=47 // pred_fallthru
          _
      $region48: #{_medusa_forward_2d.2} parent=5 // pred_fallthru
        _
    $region6: #{_medusa_forward_2d.2} parent=1 // loop_footer
      %s19 = sadd.s32 1, %s15
    $region7: #{_medusa_forward_2d.2} parent=1 // loop_footer_branch
      %14 = sbr.rel target = $region3
    $region8: #{_medusa_forward_2d.2} parent=1 // loop_exit
      _
    %405 = vsyncpa [#allocation3], 1
    %s406 = scalar_lea.sflag [#allocation3], 1
    %407 = vsyncpa %s406, 1
    %408 = vsyncpa [#allocation5], 1
    %s409 = scalar_lea.sflag [#allocation5], 1
    %410 = vsyncpa %s409, 1

// kernel: _medusa_forward_2d.3
$region0: #{_medusa_forward_2d.3}
  #allocation0 [shape = 'u32[]', space=smem, size = 0x4, offset = 0x4, fixed_abs, tag = 'smem constant byte address 0x4 - core index']
  #allocation1 [shape = 'u32[144,128]{1,0:T(1,128)}', space=vmem, size = 0x12000, scoped, tag = 'internal scratch']
  %s0 = inlined_call_operand.vmem [shape: bf16[4,16,32], index: 0, kind: input, shape index: {}]
  %s1 = inlined_call_operand.vmem [shape: bf16[4,32,256], index: 1, kind: input, shape index: {}]
  %s2 = inlined_call_operand.hbm [shape: f32[4,16,256], index: 2, kind: output, shape index: {}]
  %s3 = sld [smem:[#allocation0]]
  $region41: #{_medusa_forward_2d.3} parent=0
    _
  %s5 = ssub.s32 1, %s3
  %s6 = scalar_select 0, %s5, %s3
  $region1: #{_medusa_forward_2d.3} parent=0
    #allocation2 [shape = 'u8[32768]{0}', space=vmem, size = 0x8000, scoped, tag = 'output window, operand 0']
    #allocation3 [shape = 's32[2]{0}', space=sflag, size = 0x8, scoped, tag = 'scoped memory for _medusa_forward_2d.3']
    %7 = vsyncpa [#allocation3], 0
    %s8 = scalar_lea.sflag [#allocation3], 1
    %9 = vsyncpa %s8, 0
    loop: start=0, step=1, limit=6
    $region2: #{_medusa_forward_2d.3} parent=1 // loop_pre_header
      _
    $region3: #{_medusa_forward_2d.3} parent=1 // loop_header
      %s11 = sphi 0, %s15
      %p12 = scmp.ge.s32.totalorder %s11, 6
      %s18 = sphi 0, %s37
      %s19 = sphi 0, %s33
      %s20 = sphi 0, %s29
      %s21 = sphi 0, %s18
      %s22 = sphi 0, %s19
      %s23 = sphi 0, %s20
      %s24 = sphi 0, %s21
      %s25 = sphi 0, %s22
      %s26 = sphi 0, %s23
      %s42 = sphi 0, %s44
      %s45 = sphi 0, %s42
      %s46 = sphi 0, %s45
      %s62 = sphi 0, %s46
      %s70 = sphi 0, %s72
      %s73 = sphi 0, %s70
      %s74 = sphi 0, %s73
      %s90 = sphi 0, %s74
      %s100 = sphi 0, %s102
      %s103 = sphi 0, %s100
      %s104 = sphi 0, %s103
      %s120 = sphi 0, %s104
    $region4: #{_medusa_forward_2d.3} parent=1 // loop_header_branch
      %14 = sbr.rel (%p12) target = $region8
    $region5: #{_medusa_forward_2d.3} parent=1 // loop_body
      %s16 = ssub.s32 %s11, 1
      %s17 = ssub.s32 %s11, 2
      %s27 = sadd.s32 1, %s20
      %p28 = scmp.ge.s32.totalorder %s27, 1
      %s29 = scalar_select %p28, 0, %s27
      %s30 = sadd.s32 1, %s19
      %s31 = scalar_select %p28, %s30, %s19
      %p32 = scmp.ge.s32.totalorder %s31, 1
      %s33 = scalar_select %p32, 0, %s31
      %s34 = sadd.s32 1, %s18
      %s35 = scalar_select %p32, %s34, %s18
      %p36 = scmp.ge.s32.totalorder %s35, 4
      %s37 = scalar_select %p36, 0, %s35
      %s38 = ssub.s32 %s18, %s37
      %s39 = ssub.s32 %s20, %s29
      %s40 = sor.u32 %s38, %s39
      %p41 = scmp.eq.s32.totalorder %s40, 0
      %s43 = sadd.s32 %s42, 1
      %s44 = scalar_select %p41, %s42, %s43
      %p47 = pneg %p41
      %p48 = scmp.eq.s32.totalorder %s11, 3
      %p49 = por %p47, %p48
      %p50 = scmp.ne.s32.totalorder %s42, %s45
      %p51 = scmp.eq.s32.totalorder %s11, 0
      %p52 = por %p50, %p51
      %p53 = scmp.ne.s32.totalorder %s42, %s45
      %p54 = scmp.eq.s32.totalorder %s16, 3
      %p55 = por %p53, %p54
      %p56 = scmp.ne.s32.totalorder %s45, %s46
      %p57 = scmp.eq.s32.totalorder %s16, 0
      %p58 = por %p56, %p57
      %p59 = scmp.ne.s32.totalorder %s45, %s46
      %p60 = scmp.eq.s32.totalorder %s17, 3
      %p61 = por %p59, %p60
      %p63 = scmp.ne.s32.totalorder %s46, %s62
      %p64 = scmp.eq.s32.totalorder %s17, 0
      %p65 = por %p63, %p64
      %s66 = ssub.s32 %s18, %s37
      %s67 = ssub.s32 %s19, %s33
      %s68 = sor.u32 %s66, %s67
      %p69 = scmp.eq.s32.totalorder %s68, 0
      %s71 = sadd.s32 %s70, 1
      %s72 = scalar_select %p69, %s70, %s71
      %p75 = pneg %p69
      %p76 = scmp.eq.s32.totalorder %s11, 3
      %p77 = por %p75, %p76
      %p78 = scmp.ne.s32.totalorder %s70, %s73
      %p79 = scmp.eq.s32.totalorder %s11, 0
      %p80 = por %p78, %p79
      %p81 = scmp.ne.s32.totalorder %s70, %s73
      %p82 = scmp.eq.s32.totalorder %s16, 3
      %p83 = por %p81, %p82
      %p84 = scmp.ne.s32.totalorder %s73, %s74
      %p85 = scmp.eq.s32.totalorder %s16, 0
      %p86 = por %p84, %p85
      %p87 = scmp.ne.s32.totalorder %s73, %s74
      %p88 = scmp.eq.s32.totalorder %s17, 3
      %p89 = por %p87, %p88
      %p91 = scmp.ne.s32.totalorder %s74, %s90
      %p92 = scmp.eq.s32.totalorder %s17, 0
      %p93 = por %p91, %p92
      %s94 = ssub.s32 %s18, %s37
      %s95 = ssub.s32 %s20, %s29
      %s96 = sor.u32 %s94, %s95
      %s97 = ssub.s32 %s19, %s33
      %s98 = sor.u32 %s96, %s97
      %p99 = scmp.eq.s32.totalorder %s98, 0
      %s101 = sadd.s32 %s100, 1
      %s102 = scalar_select %p99, %s100, %s101
      %p105 = pneg %p99
      %p106 = scmp.eq.s32.totalorder %s11, 3
      %p107 = por %p105, %p106
      %p108 = scmp.ne.s32.totalorder %s100, %s103
      %p109 = scmp.eq.s32.totalorder %s11, 0
      %p110 = por %p108, %p109
      %p111 = scmp.ne.s32.totalorder %s100, %s103
      %p112 = scmp.eq.s32.totalorder %s16, 3
      %p113 = por %p111, %p112
      %p114 = scmp.ne.s32.totalorder %s103, %s104
      %p115 = scmp.eq.s32.totalorder %s16, 0
      %p116 = por %p114, %p115
      %p117 = scmp.ne.s32.totalorder %s103, %s104
      %p118 = scmp.eq.s32.totalorder %s17, 3
      %p119 = por %p117, %p118
      %p121 = scmp.ne.s32.totalorder %s104, %s120
      %p122 = scmp.eq.s32.totalorder %s17, 0
      %p123 = por %p121, %p122
      %p124 = scmp.le.s32.totalorder 1, %s11
      %p125 = scmp.lt.s32.totalorder %s11, 5
      %p126 = pnand %p124, %p125
      %p127 = pneg %p126
      // Predicated region
      $region9: #{_medusa_forward_2d.3} parent=5 // pred_check
        _
      $region10: #{_medusa_forward_2d.3} parent=5 // pred_check_branch
        %129 = sbr.rel (%p126) target = $region12
      $region11: #{_medusa_forward_2d.3} parent=5 // pred_region
        %s130 = ssub.s32 %s11, 1
      $region12: #{_medusa_forward_2d.3} parent=5 // pred_fallthru
        _
      %p131 = scmp.lt.s32.totalorder %s11, 4
      // Predicated region
      $region13: #{_medusa_forward_2d.3} parent=5 // pred_check
        %p132 = pneg %p131
      $region14: #{_medusa_forward_2d.3} parent=5 // pred_check_branch
        %134 = sbr.rel (%p132) target = $region16
      $region15: #{_medusa_forward_2d.3} parent=5 // pred_region
        // Predicated region
        $region17: #{_medusa_forward_2d.3} parent=15 // pred_check
          %p135 = pneg %p52
        $region18: #{_medusa_forward_2d.3} parent=15 // pred_check_branch
          %137 = sbr.rel (%p135) target = $region20
        $region19: #{_medusa_forward_2d.3} parent=15 // pred_region
          %s138 = smul.u32 2, %s20
          %p139 = scmp.lt.s32.totalorder %s18, 3
          %s140 = scalar_select %p139, %s18, 3
          %p141 = scmp.lt.s32.totalorder %s138, 1
          %s142 = scalar_select %p141, %s138, 1
          %s143 = smul.addr %s140, 2
          %s144 = sadd.s32 %s142, %s143
          %s145 = smul.addr %s144, 4
          %s146 = scalar_lea.vmem %s0, %s145
          %s147 = smul.u32 2, %s20
        $region20: #{_medusa_forward_2d.3} parent=15 // pred_fallthru
          _
        // Predicated region
        $region21: #{_medusa_forward_2d.3} parent=15 // pred_check
          %p148 = pneg %p80
        $region22: #{_medusa_forward_2d.3} parent=15 // pred_check_branch
          %150 = sbr.rel (%p148) target = $region24
        $region23: #{_medusa_forward_2d.3} parent=15 // pred_region
          %s151 = smul.u32 2, %s19
          %p152 = scmp.lt.s32.totalorder %s18, 3
          %s153 = scalar_select %p152, %s18, 3
          %p154 = scmp.lt.s32.totalorder %s151, 1
          %s155 = scalar_select %p154, %s151, 1
          %s156 = smul.addr %s153, 8
          %s157 = sadd.s32 %s155, %s156
          %s158 = smul.addr %s157, 4
          %s159 = scalar_lea.vmem %s1, %s158
          %s160 = smul.u32 2, %s19
        $region24: #{_medusa_forward_2d.3} parent=15 // pred_fallthru
          _
      $region16: #{_medusa_forward_2d.3} parent=5 // pred_fallthru
        _
      %p161 = scmp.le.s32.totalorder 1, %s11
      %p162 = scmp.lt.s32.totalorder %s11, 5
      %p163 = pnand %p161, %p162
      %p164 = pneg %p163
      // Predicated region
      $region25: #{_medusa_forward_2d.3} parent=5 // pred_check
        _
      $region26: #{_medusa_forward_2d.3} parent=5 // pred_check_branch
        %166 = sbr.rel (%p163) target = $region28
      $region27: #{_medusa_forward_2d.3} parent=5 // pred_region
        %s167 = ssub.s32 %s11, 1
        %s168 = smul.u32 2, %s23
        %p169 = scmp.lt.s32.totalorder %s21, 3
        %s170 = scalar_select %p169, %s21, 3
        %p171 = scmp.lt.s32.totalorder %s168, 1
        %s172 = scalar_select %p171, %s168, 1
        %s173 = smul.addr %s170, 2
        %s174 = sadd.s32 %s172, %s173
        %s175 = smul.addr %s174, 4
        %s176 = scalar_lea.vmem %s0, %s175
        %p177 = pneg %p58
        %p178 = pneg %p55
        %s179 = smul.u32 2, %s22
        %p180 = scmp.lt.s32.totalorder %s21, 3
        %s181 = scalar_select %p180, %s21, 3
        %p182 = scmp.lt.s32.totalorder %s179, 1
        %s183 = scalar_select %p182, %s179, 1
        %s184 = smul.addr %s181, 8
        %s185 = sadd.s32 %s183, %s184
        %s186 = smul.addr %s185, 4
        %s187 = scalar_lea.vmem %s1, %s186
        %p188 = pneg %p86
        %p189 = pneg %p83
        %p190 = pneg %p116
        %p191 = pneg %p113
        %s192 = sand.u32 %s103, 1
        %s193 = scalar_lea.sflag [#allocation3], %s192
        %s194 = sand.u32 %s103, 1
        %s195 = smul.addr %s194, 32
        %s196 = scalar_lea.vmem [#allocation2], %s195
        %s197 = smul.u32 2, %s23
        %p198 = scmp.lt.s32.totalorder %s21, 3
        %s199 = scalar_select %p198, %s21, 3
        %p200 = scmp.lt.s32.totalorder %s197, 1
        %s201 = scalar_select %p200, %s197, 1
        %s202 = smul.addr %s199, 2
        %s203 = sadd.s32 %s201, %s202
        %s204 = smul.addr %s203, 4
        %s205 = scalar_lea.vmem %s0, %s204
        %s206 = smul.u32 2, %s23
        %s207 = smul.u32 2, %s22
        %p208 = scmp.lt.s32.totalorder %s21, 3
        %s209 = scalar_select %p208, %s21, 3
        %p210 = scmp.lt.s32.totalorder %s207, 1
        %s211 = scalar_select %p210, %s207, 1
        %s212 = smul.addr %s209, 8
        %s213 = sadd.s32 %s211, %s212
        %s214 = smul.addr %s213, 4
        %s215 = scalar_lea.vmem %s1, %s214
        %s216 = smul.u32 2, %s22
        %s217 = smul.u32 2, %s23
        %s218 = smul.u32 2, %s22
        %v220 = vld [vmem:[%s205] sm:$0xf]
        %v221 = vld [vmem:[%s205 + $0x4] sm:$0xf]
        %v222 = vld [vmem:[%s215] sm:$0xff]
        %v223 = vld [vmem:[%s215 + $0x8] sm:$0xff]
        %v224 = vld [vmem:[%s215 + $0x10] sm:$0xff]
        %v225 = vld [vmem:[%s215 + $0x18] sm:$0xff]
        %v228 = vunpack.c.l.b16 %v220
        %v229 = vunpack.c.l.b16 %v221
        %v230 = vpack.c.b16 %v229, %v228
        %v235 = vunpack.c.l.b16 %v222
        %v236 = vunpack.c.h.b16 %v222
        %v237 = vunpack.c.l.b16 %v223
        %v238 = vunpack.c.h.b16 %v223
        %v239 = vunpack.c.l.b16 %v224
        %v240 = vunpack.c.h.b16 %v224
        %v241 = vunpack.c.l.b16 %v225
        %v242 = vunpack.c.h.b16 %v225
        %v243 = vpack.c.b16 %v237, %v235
        %v244 = vpack.c.b16 %v238, %v236
        %v245 = vpack.c.b16 %v241, %v239
        %v246 = vpack.c.b16 %v242, %v240
        %vm251 = vcmask 261120
        %v253 = vsel %vm251, %v230, 0
        %255 = vmatprep.subr.bf16.mxu0 %v244
        %256 = vmatpush1.bf16.msra.mxu0 %v243
        %257 = vmatprep.subr.bf16.mxu0 %v246
        %258 = vmatpush1.bf16.msra.mxu0 %v245
        %259 = vmatprep.subr.bf16.mxu0 0
        %260 = vmatpush1.bf16.msra.mxu0 0
        %261 = vmatprep.subr.bf16.mxu0 0
        %262 = vmatpush1.bf16.msra.mxu0 0
        %263 = vmatprep.subr.bf16.mxu0 0
        %264 = vmatpush1.bf16.msra.mxu0 0
        %265 = vmatprep.subr.bf16.mxu0 0
        %266 = vmatpush1.bf16.msra.mxu0 0
        %267 = vmatprep.subr.bf16.mxu0 0
        %268 = vmatpush1.bf16.msra.mxu0 0
        %269 = vmatprep.subr.bf16.mxu0 0
        %270 = vmatpush1.bf16.msra.mxu0 0
        %271 = vmatprep.subr.bf16.mxu0 0
        %272 = vmatpush1.bf16.msra.mxu0 0
        %273 = vmatprep.subr.bf16.mxu0 0
        %274 = vmatpush1.bf16.msra.mxu0 0
        %275 = vmatprep.subr.bf16.mxu0 0
        %276 = vmatpush1.bf16.msra.mxu0 0
        %277 = vmatprep.subr.bf16.mxu0 0
        %278 = vmatpush1.bf16.msra.mxu0 0
        %279 = vmatprep.subr.bf16.mxu0 0
        %280 = vmatpush1.bf16.msra.mxu0 0
        %281 = vmatprep.subr.bf16.mxu0 0
        %282 = vmatpush1.bf16.msra.mxu0 0
        %283 = vmatprep.subr.bf16.mxu0 0
        %284 = vmatpush1.bf16.msra.mxu0 0
        %285 = vmatprep.subr.bf16.mxu0 0
        %286 = vmatpush1.bf16.msra.mxu0 0
        %287 = vmatprep.mubr.bf16.mxu0 0
        %288 = vmatmul.mubr.bf16.gmra.mrb[0].mxu0 %v253
        %v289 = vpop.f32.mrb[0].mxu0
        %v290 = vadd.f32 0.0, %v289
        %v291 = vpop.f32.mrb[0].mxu0
        %v292 = vadd.f32 0.0, %v291
        %v293 = vpop.f32.mrb[0].mxu0
        %v294 = vadd.f32 0.0, %v293
        %v295 = vpop.f32.mrb[0].mxu0
        %v296 = vadd.f32 0.0, %v295
        %297 = vdwg.mxu0
        %298 = vst [vmem:[%s196] sm:$0xff] %v290
        %299 = vst [vmem:[%s196 + $0x8] sm:$0xff] %v292
        %300 = vst [vmem:[%s196 + $0x10] sm:$0xff] %v294
        %301 = vst [vmem:[%s196 + $0x18] sm:$0xff] %v296
        %s302 = sand.u32 %s103, 1
        %s303 = scalar_lea.sflag [#allocation3], %s302
        %s304 = sand.u32 %s103, 1
        %s305 = smul.addr %s304, 32
        %s306 = scalar_lea.vmem [#allocation2], %s305
        // Predicated region
        $region29: #{_medusa_forward_2d.3} parent=27 // pred_check
          %p307 = pneg %p113
        $region30: #{_medusa_forward_2d.3} parent=27 // pred_check_branch
          %309 = sbr.rel (%p307) target = $region32
        $region31: #{_medusa_forward_2d.3} parent=27 // pred_region
          %s310 = smul.u32 2, %s23
          %s311 = smul.u32 2, %s22
          %s313 = ssub.s32 512, 512
          %314 = vsyncadd %s303, %s313
          %s315 = smul.addr %s310, 2
          %s316 = sadd.s32 %s311, %s315
          %s317 = smul.addr %s21, 4
          %s318 = sadd.s32 %s316, %s317
          %s319 = smul.addr %s318, 128
          %s320 = scalar_lea.hbm %s2, %s319
          %s321 = sshll.u32 %s306, 4
          %s322 = int_to_ptr.vmem [resolvable:$true] %s321
          %327 = dma.vmem_to_hbm [thread:$0]  %s322, 512, %s320, %s303, 256, 256, 16
        $region32: #{_medusa_forward_2d.3} parent=27 // pred_fallthru
          _
      $region28: #{_medusa_forward_2d.3} parent=5 // pred_fallthru
        _
      %p328 = scmp.le.s32.totalorder 2, %s11
      // Predicated region
      $region33: #{_medusa_forward_2d.3} parent=5 // pred_check
        %p329 = pneg %p328
      $region34: #{_medusa_forward_2d.3} parent=5 // pred_check_branch
        %331 = sbr.rel (%p329) target = $region36
      $region35: #{_medusa_forward_2d.3} parent=5 // pred_region
        %s332 = ssub.s32 %s11, 2
        // Predicated region
        $region37: #{_medusa_forward_2d.3} parent=35 // pred_check
          %p333 = pneg %p119
        $region38: #{_medusa_forward_2d.3} parent=35 // pred_check_branch
          %335 = sbr.rel (%p333) target = $region40
        $region39: #{_medusa_forward_2d.3} parent=35 // pred_region
          %s336 = sand.u32 %s104, 1
          %s337 = scalar_lea.sflag [#allocation3], %s336
          %s338 = sand.u32 %s104, 1
          %s339 = smul.addr %s338, 32
          %s340 = scalar_lea.vmem [#allocation2], %s339
          %341 = dma.done %s337, 512
        $region40: #{_medusa_forward_2d.3} parent=35 // pred_fallthru
          _
      $region36: #{_medusa_forward_2d.3} parent=5 // pred_fallthru
        _
    $region6: #{_medusa_forward_2d.3} parent=1 // loop_footer
      %s15 = sadd.s32 1, %s11
    $region7: #{_medusa_forward_2d.3} parent=1 // loop_footer_branch
      %10 = sbr.rel target = $region3
    $region8: #{_medusa_forward_2d.3} parent=1 // loop_exit
      _
    %342 = vsyncpa [#allocation3], 1
    %s343 = scalar_lea.sflag [#allocation3], 1
    %344 = vsyncpa %s343, 1

</llo_original>
